<compile_context>
chip_gen: v6e
topology: v6e:2x2x1
jax: 0.10.0
libtpu: 0.0.40
codegen_flags: <defaults>
</compile_context>

<pallas_src>
import functools

import jax
import jax.numpy as jnp
import numpy as np
from jax import lax
from jax.experimental import pallas as pl
from jax.experimental.pallas import tpu as pltpu

# ------------------------- problem sizes (small) -------------------------
N_BATCH     = 2     # batch
SEQ         = 16    # context sequence length
D_MODEL     = 32    # d_model
CONTEXT_DIM = 16    # context_dim (kdim / vdim)
N_HEAD      = 4     # n_head
N_QUERIES   = 8     # n_queries
HEAD_DIM    = D_MODEL // N_HEAD
EPS         = 1e-5


def _layernorm(v, w, b):
    mu = jnp.mean(v, axis=-1, keepdims=True)
    var = jnp.mean((v - mu) ** 2, axis=-1, keepdims=True)
    return (v - mu) * lax.rsqrt(var + EPS) * w + b


def _attn_pooler_kernel(x_ref, q_ref, wq_ref, wkv_ref, bkv_ref, wo_ref,
                        mask_ref, pd_ref, pc_ref, o_ref, *,
                        d_model, n_head, n_queries):
    # x_ref: (SEQ, CONTEXT_DIM) tile for this batch element (grid axis 0).
    x = x_ref[...].astype(jnp.float32)
    q = q_ref[...].astype(jnp.float32)              # (Nq, D)

    # Packed small params:
    #   pd = [lnq_w, lnq_b, bq*scale, bo]  (4, D)
    #   pc = [lnk_w, lnk_b]                (2, C)
    lnq_w, lnq_b, bq_s, bo = pd_ref[0], pd_ref[1], pd_ref[2], pd_ref[3]
    lnk_w, lnk_b = pc_ref[0], pc_ref[1]
    head_mask = mask_ref[...]                        # (H*Nq, D) constant

    # --- LayerNorms (ln_k on x, ln_q on the query table) ---
    xn = _layernorm(x, lnk_w, lnk_b)                 # (SEQ, C)
    qn = _layernorm(q, lnq_w, lnq_b)                 # (Nq, D)

    # --- projections: Q (scale pre-folded into wq/bq), fused K/V + fused bias ---
    Q = jnp.dot(qn, wq_ref[...], preferred_element_type=jnp.float32) + bq_s  # (Nq, D)
    KV = jnp.dot(xn, wkv_ref[...],
                 preferred_element_type=jnp.float32) + bkv_ref[...]          # (SEQ, 2D)
    K = KV[:, :d_model]                                                      # (SEQ, D)
    V = KV[:, d_model:]                                                      # (SEQ, D)

    # --- all-head scores via ONE matmul ---
    # Row r = h*Nq + q of the stacked query table keeps only head h's feature
    # columns (precomputed mask), so contracting the full feature dim against
    # K yields exact per-head scores for all heads in a single dot_general.
    q_stack = jnp.concatenate([Q] * n_head, axis=0) * head_mask              # (H*Nq, D)
    scores = lax.dot_general(q_stack, K, (((1,), (1,)), ((), ())),
                             preferred_element_type=jnp.float32)             # (H*Nq, SEQ)

    # --- softmax over the sequence (exact normalization) ---
    s = scores - jnp.max(scores, axis=-1, keepdims=True)
    p = jnp.exp(s)
    p = p / jnp.sum(p, axis=-1, keepdims=True)

    # --- context: P @ V, then "concat heads" == sum of head-masked row groups ---
    ctx_full = jnp.dot(p, V, preferred_element_type=jnp.float32) * head_mask  # (H*Nq, D)
    ctx = ctx_full[0:n_queries]
    for h in range(1, n_head):
        ctx = ctx + ctx_full[h * n_queries:(h + 1) * n_queries]               # (Nq, D)

    # --- output projection, stored directly into this batch's output block ---
    out = jnp.dot(ctx, wo_ref[...], preferred_element_type=jnp.float32) + bo
    o_ref[...] = out.astype(o_ref.dtype)


def pack_params(p, *, n_head=N_HEAD):
    """Pack / pre-fold the many tiny parameters (runs ONCE, not per call)."""
    nq, d_model = p["query"].shape
    head_dim = d_model // n_head
    scale = 1.0 / float(np.sqrt(head_dim))
    # Trace-time head mask: row r of the stacked query table keeps only head
    # (r // n_queries)'s feature columns.
    rows = np.arange(n_head * nq) // nq
    cols = np.arange(d_model) // head_dim
    head_mask = (rows[:, None] == cols[None, :]).astype(np.float32)
    return {
        "query": p["query"],
        "wq": p["wq"] * scale,                                    # scale folded in
        "wkv": jnp.concatenate([p["wk"], p["wv"]], axis=1),       # (C, 2D)
        "bkv": jnp.concatenate([p["bk"], p["bv"]])[None, :],      # (1, 2D)
        "wo": p["wo"],
        "head_mask": jnp.asarray(head_mask),                      # (H*Nq, D)
        "p_d": jnp.stack([p["lnq_w"], p["lnq_b"],
                          p["bq"] * scale, p["bo"]]),             # (4, D)
        "p_c": jnp.stack([p["lnk_w"], p["lnk_b"]]),               # (2, C)
    }


def attentional_pooler(x, packed):
    """x: (N, SEQ, CONTEXT_DIM) -> (N, N_QUERIES, D_MODEL)."""
    n, seq, cdim = x.shape
    nq, d_model = packed["query"].shape

    kernel = functools.partial(_attn_pooler_kernel, d_model=d_model,
                               n_head=N_HEAD, n_queries=nq)

    def _resident(a):
        # Weight/constant operand: same block every grid step -> loaded once,
        # stays resident in VMEM across the pipelined batch loop.
        return pl.BlockSpec(a.shape, lambda b: (0,) * a.ndim)

    out2 = pl.pallas_call(
        kernel,
        out_shape=jax.ShapeDtypeStruct((n * nq, d_model), x.dtype),
        grid=(n,),
        in_specs=[
            pl.BlockSpec((seq, cdim), lambda b: (b, 0)),          # x batch tile
            _resident(packed["query"]),
            _resident(packed["wq"]),
            _resident(packed["wkv"]),
            _resident(packed["bkv"]),
            _resident(packed["wo"]),
            _resident(packed["head_mask"]),
            _resident(packed["p_d"]),
            _resident(packed["p_c"]),
        ],
        out_specs=pl.BlockSpec((nq, d_model), lambda b: (b, 0)),
        compiler_params=pltpu.CompilerParams(
            dimension_semantics=("parallel",)),                   # megacore batch shard
    )(x.reshape(n * seq, cdim), packed["query"], packed["wq"],
      packed["wkv"], packed["bkv"], packed["wo"], packed["head_mask"],
      packed["p_d"], packed["p_c"])
    return out2.reshape(n, nq, d_model)


# --------------------------- pure-JAX reference ---------------------------
def reference(x, p):
    scale = 1.0 / float(np.sqrt(HEAD_DIM))
    N = x.shape[0]
    xn = _layernorm(x.astype(jnp.float32), p["lnk_w"], p["lnk_b"])
    qn = _layernorm(p["query"].astype(jnp.float32), p["lnq_w"], p["lnq_b"])
    Q = qn @ p["wq"] + p["bq"]                         # (Nq, D)
    K = xn @ p["wk"] + p["bk"]                         # (N, S, D)
    V = xn @ p["wv"] + p["bv"]
    Qh = Q.reshape(N_QUERIES, N_HEAD, HEAD_DIM)
    Kh = K.reshape(N, SEQ, N_HEAD, HEAD_DIM)
    Vh = V.reshape(N, SEQ, N_HEAD, HEAD_DIM)
    s = jnp.einsum("qhd,nkhd->nhqk", Qh, Kh) * scale
    pattn = jax.nn.softmax(s, axis=-1)
    ctx = jnp.einsum("nhqk,nkhd->nqhd", pattn, Vh).reshape(N, N_QUERIES, D_MODEL)
    return (ctx @ p["wo"] + p["bo"]).astype(x.dtype)


# ------------------------------- main -------------------------------------
if __name__ == "__main__":
    ks = jax.random.split(jax.random.PRNGKey(0), 14)

    params = {
        # nn.Parameter(torch.randn(n_queries, d_model))
        "query": jax.random.normal(ks[0], (N_QUERIES, D_MODEL), jnp.float32),
        # LayerNorm affine params (deterministic, non-trivial)
        "lnq_w": 1.0 + 0.1 * jax.random.normal(ks[1], (D_MODEL,), jnp.float32),
        "lnq_b": 0.1 * jax.random.normal(ks[2], (D_MODEL,), jnp.float32),
        "lnk_w": 1.0 + 0.1 * jax.random.normal(ks[3], (CONTEXT_DIM,), jnp.float32),
        "lnk_b": 0.1 * jax.random.normal(ks[4], (CONTEXT_DIM,), jnp.float32),
        # MHA separate-projection weights, stored pre-transposed as (in, out)
        "wq": 0.1 * jax.random.normal(ks[5], (D_MODEL, D_MODEL), jnp.float32),
        "wk": 0.1 * jax.random.normal(ks[6], (CONTEXT_DIM, D_MODEL), jnp.float32),
        "wv": 0.1 * jax.random.normal(ks[7], (CONTEXT_DIM, D_MODEL), jnp.float32),
        "wo": 0.1 * jax.random.normal(ks[8], (D_MODEL, D_MODEL), jnp.float32),
        "bq": 0.05 * jax.random.normal(ks[9], (D_MODEL,), jnp.float32),
        "bk": 0.05 * jax.random.normal(ks[10], (D_MODEL,), jnp.float32),
        "bv": 0.05 * jax.random.normal(ks[11], (D_MODEL,), jnp.float32),
        "bo": jnp.zeros((D_MODEL,), jnp.float32),
    }
    x = jax.random.normal(ks[12], (N_BATCH, SEQ, CONTEXT_DIM), jnp.float32)

    packed = pack_params(params)
    out = attentional_pooler(x, packed)
    out = jax.block_until_ready(out)

    ref = reference(x, params)
    # exact softmax normalization -> tight agreement with the fp32 reference
    np.testing.assert_allclose(np.asarray(out), np.asarray(ref), rtol=3e-4, atol=3e-4)

    assert out.shape == (N_BATCH, N_QUERIES, D_MODEL)
    print("KERNEL_OK")
</pallas_src>

<mosaic_0001>
module attributes {stable_mosaic.version = 11 : i64} {
  func.func @_attn_pooler_kernel(%arg0: i32, %arg1: memref<16x16xf32, #tpu.memory_space<vmem>>, %arg2: memref<8x32xf32, #tpu.memory_space<vmem>>, %arg3: memref<32x32xf32, #tpu.memory_space<vmem>>, %arg4: memref<16x64xf32, #tpu.memory_space<vmem>>, %arg5: memref<1x64xf32, #tpu.memory_space<vmem>>, %arg6: memref<32x32xf32, #tpu.memory_space<vmem>>, %arg7: memref<32x32xf32, #tpu.memory_space<vmem>>, %arg8: memref<4x32xf32, #tpu.memory_space<vmem>>, %arg9: memref<2x16xf32, #tpu.memory_space<vmem>>, %arg10: memref<8x32xf32, #tpu.memory_space<vmem>>) attributes {dimension_semantics = [#tpu.dimension_semantics<parallel>], iteration_bounds = array<i64: 2>, scalar_prefetch = 0 : i64, scratch_operands = 0 : i64, tpu.core_type = #tpu.core_type<tc>, window_params = [{transform_indices = @transform_0, window_bounds = array<i64: 16, 16>}, {pipeline_mode = #tpu.pipeline_mode<synchronous>, transform_indices = @transform_1, window_bounds = array<i64: 8, 32>}, {pipeline_mode = #tpu.pipeline_mode<synchronous>, transform_indices = @transform_2, window_bounds = array<i64: 32, 32>}, {pipeline_mode = #tpu.pipeline_mode<synchronous>, transform_indices = @transform_3, window_bounds = array<i64: 16, 64>}, {pipeline_mode = #tpu.pipeline_mode<synchronous>, transform_indices = @transform_4, window_bounds = array<i64: 1, 64>}, {pipeline_mode = #tpu.pipeline_mode<synchronous>, transform_indices = @transform_5, window_bounds = array<i64: 32, 32>}, {pipeline_mode = #tpu.pipeline_mode<synchronous>, transform_indices = @transform_6, window_bounds = array<i64: 32, 32>}, {pipeline_mode = #tpu.pipeline_mode<synchronous>, transform_indices = @transform_7, window_bounds = array<i64: 4, 32>}, {pipeline_mode = #tpu.pipeline_mode<synchronous>, transform_indices = @transform_8, window_bounds = array<i64: 2, 16>}, {transform_indices = @transform_9, window_bounds = array<i64: 8, 32>}]} {
    %c0 = arith.constant 0 : index
    %c0_0 = arith.constant 0 : index
    %0 = vector.load %arg1[%c0, %c0_0] : memref<16x16xf32, #tpu.memory_space<vmem>>, vector<16x16xf32>
    %c0_1 = arith.constant 0 : index
    %c0_2 = arith.constant 0 : index
    %1 = vector.load %arg2[%c0_1, %c0_2] : memref<8x32xf32, #tpu.memory_space<vmem>>, vector<8x32xf32>
    %c0_3 = arith.constant 0 : index
    %c0_4 = arith.constant 0 : index
    %2 = vector.load %arg8[%c0_3, %c0_4] : memref<4x32xf32, #tpu.memory_space<vmem>>, vector<1x32xf32>
    %3 = vector.shape_cast %2 : vector<1x32xf32> to vector<32xf32>
    %c1 = arith.constant 1 : index
    %c0_5 = arith.constant 0 : index
    %4 = vector.load %arg8[%c1, %c0_5] : memref<4x32xf32, #tpu.memory_space<vmem>>, vector<1x32xf32>
    %5 = vector.shape_cast %4 : vector<1x32xf32> to vector<32xf32>
    %c2 = arith.constant 2 : index
    %c0_6 = arith.constant 0 : index
    %6 = vector.load %arg8[%c2, %c0_6] : memref<4x32xf32, #tpu.memory_space<vmem>>, vector<1x32xf32>
    %7 = vector.shape_cast %6 : vector<1x32xf32> to vector<32xf32>
    %c3 = arith.constant 3 : index
    %c0_7 = arith.constant 0 : index
    %8 = vector.load %arg8[%c3, %c0_7] : memref<4x32xf32, #tpu.memory_space<vmem>>, vector<1x32xf32>
    %9 = vector.shape_cast %8 : vector<1x32xf32> to vector<32xf32>
    %c0_8 = arith.constant 0 : index
    %c0_9 = arith.constant 0 : index
    %10 = vector.load %arg9[%c0_8, %c0_9] : memref<2x16xf32, #tpu.memory_space<vmem>>, vector<1x16xf32>
    %11 = vector.shape_cast %10 : vector<1x16xf32> to vector<16xf32>
    %c1_10 = arith.constant 1 : index
    %c0_11 = arith.constant 0 : index
    %12 = vector.load %arg9[%c1_10, %c0_11] : memref<2x16xf32, #tpu.memory_space<vmem>>, vector<1x16xf32>
    %13 = vector.shape_cast %12 : vector<1x16xf32> to vector<16xf32>
    %c0_12 = arith.constant 0 : index
    %c0_13 = arith.constant 0 : index
    %14 = vector.load %arg7[%c0_12, %c0_13] : memref<32x32xf32, #tpu.memory_space<vmem>>, vector<32x32xf32>
    %cst = arith.constant dense<0.000000e+00> : vector<16xf32>
    %15 = vector.multi_reduction <add>, %0, %cst [1] : vector<16x16xf32> to vector<16xf32>
    %16 = vector.shape_cast %15 : vector<16xf32> to vector<16x1xf32>
    %cst_14 = arith.constant 1.600000e+01 : f32
    %17 = vector.broadcast %cst_14 : f32 to vector<16x1xf32>
    %18 = arith.divf %16, %17 : vector<16x1xf32>
    %19 = vector.broadcast %18 : vector<16x1xf32> to vector<16x16xf32>
    %20 = arith.subf %0, %19 : vector<16x16xf32>
    %21 = arith.mulf %20, %20 : vector<16x16xf32>
    %cst_15 = arith.constant dense<0.000000e+00> : vector<16xf32>
    %22 = vector.multi_reduction <add>, %21, %cst_15 [1] : vector<16x16xf32> to vector<16xf32>
    %23 = vector.shape_cast %22 : vector<16xf32> to vector<16x1xf32>
    %cst_16 = arith.constant 1.600000e+01 : f32
    %24 = vector.broadcast %cst_16 : f32 to vector<16x1xf32>
    %25 = arith.divf %23, %24 : vector<16x1xf32>
    %26 = vector.broadcast %18 : vector<16x1xf32> to vector<16x16xf32>
    %27 = arith.subf %0, %26 : vector<16x16xf32>
    %cst_17 = arith.constant 9.99999974E-6 : f32
    %28 = vector.broadcast %cst_17 : f32 to vector<16x1xf32>
    %29 = arith.addf %25, %28 : vector<16x1xf32>
    %30 = math.rsqrt %29 : vector<16x1xf32>
    %31 = vector.broadcast %30 : vector<16x1xf32> to vector<16x16xf32>
    %32 = arith.mulf %27, %31 : vector<16x16xf32>
    %33 = vector.shape_cast %11 : vector<16xf32> to vector<1x16xf32>
    %34 = vector.broadcast %33 : vector<1x16xf32> to vector<16x16xf32>
    %35 = arith.mulf %32, %34 : vector<16x16xf32>
    %36 = vector.shape_cast %13 : vector<16xf32> to vector<1x16xf32>
    %37 = vector.broadcast %36 : vector<1x16xf32> to vector<16x16xf32>
    %38 = arith.addf %35, %37 : vector<16x16xf32>
    %cst_18 = arith.constant dense<0.000000e+00> : vector<8xf32>
    %39 = vector.multi_reduction <add>, %1, %cst_18 [1] : vector<8x32xf32> to vector<8xf32>
    %40 = vector.shape_cast %39 : vector<8xf32> to vector<8x1xf32>
    %cst_19 = arith.constant 3.200000e+01 : f32
    %41 = vector.broadcast %cst_19 : f32 to vector<8x1xf32>
    %42 = arith.divf %40, %41 : vector<8x1xf32>
    %43 = vector.broadcast %42 : vector<8x1xf32> to vector<8x32xf32>
    %44 = arith.subf %1, %43 : vector<8x32xf32>
    %45 = arith.mulf %44, %44 : vector<8x32xf32>
    %cst_20 = arith.constant dense<0.000000e+00> : vector<8xf32>
    %46 = vector.multi_reduction <add>, %45, %cst_20 [1] : vector<8x32xf32> to vector<8xf32>
    %47 = vector.shape_cast %46 : vector<8xf32> to vector<8x1xf32>
    %cst_21 = arith.constant 3.200000e+01 : f32
    %48 = vector.broadcast %cst_21 : f32 to vector<8x1xf32>
    %49 = arith.divf %47, %48 : vector<8x1xf32>
    %50 = vector.broadcast %42 : vector<8x1xf32> to vector<8x32xf32>
    %51 = arith.subf %1, %50 : vector<8x32xf32>
    %cst_22 = arith.constant 9.99999974E-6 : f32
    %52 = vector.broadcast %cst_22 : f32 to vector<8x1xf32>
    %53 = arith.addf %49, %52 : vector<8x1xf32>
    %54 = math.rsqrt %53 : vector<8x1xf32>
    %55 = vector.broadcast %54 : vector<8x1xf32> to vector<8x32xf32>
    %56 = arith.mulf %51, %55 : vector<8x32xf32>
    %57 = vector.shape_cast %3 : vector<32xf32> to vector<1x32xf32>
    %58 = vector.broadcast %57 : vector<1x32xf32> to vector<8x32xf32>
    %59 = arith.mulf %56, %58 : vector<8x32xf32>
    %60 = vector.shape_cast %5 : vector<32xf32> to vector<1x32xf32>
    %61 = vector.broadcast %60 : vector<1x32xf32> to vector<8x32xf32>
    %62 = arith.addf %59, %61 : vector<8x32xf32>
    %c0_23 = arith.constant 0 : index
    %c0_24 = arith.constant 0 : index
    %63 = vector.load %arg3[%c0_23, %c0_24] : memref<32x32xf32, #tpu.memory_space<vmem>>, vector<32x32xf32>
    %cst_25 = arith.constant dense<0.000000e+00> : vector<8x32xf32>
    %64 = tpu.matmul %62, %63, %cst_25 {dimension_numbers = #tpu.dot_dimension_numbers<[1], [0], [0], [1], [0, 0, 1, 1], [], []>} : vector<8x32xf32>, vector<32x32xf32>, vector<8x32xf32> -> vector<8x32xf32>
    %65 = vector.shape_cast %7 : vector<32xf32> to vector<1x32xf32>
    %66 = vector.broadcast %65 : vector<1x32xf32> to vector<8x32xf32>
    %67 = arith.addf %64, %66 : vector<8x32xf32>
    %c0_26 = arith.constant 0 : index
    %c0_27 = arith.constant 0 : index
    %68 = vector.load %arg4[%c0_26, %c0_27] : memref<16x64xf32, #tpu.memory_space<vmem>>, vector<16x64xf32>
    %cst_28 = arith.constant dense<0.000000e+00> : vector<16x64xf32>
    %69 = tpu.matmul %38, %68, %cst_28 {dimension_numbers = #tpu.dot_dimension_numbers<[1], [0], [0], [1], [0, 0, 1, 1], [], []>} : vector<16x16xf32>, vector<16x64xf32>, vector<16x64xf32> -> vector<16x64xf32>
    %c0_29 = arith.constant 0 : index
    %c0_30 = arith.constant 0 : index
    %70 = vector.load %arg5[%c0_29, %c0_30] : memref<1x64xf32, #tpu.memory_space<vmem>>, vector<1x64xf32>
    %71 = vector.broadcast %70 : vector<1x64xf32> to vector<16x64xf32>
    %72 = arith.addf %69, %71 : vector<16x64xf32>
    %73 = vector.extract_strided_slice %72 {offsets = [0, 0], sizes = [16, 32], strides = [1, 1]} : vector<16x64xf32> to vector<16x32xf32>
    %74 = vector.extract_strided_slice %72 {offsets = [0, 32], sizes = [16, 32], strides = [1, 1]} : vector<16x64xf32> to vector<16x32xf32>
    %75 = tpu.concatenate %67, %67, %67, %67 in 0 : vector<8x32xf32>, vector<8x32xf32>, vector<8x32xf32>, vector<8x32xf32> -> vector<32x32xf32>
    %76 = arith.mulf %75, %14 : vector<32x32xf32>
    %cst_31 = arith.constant dense<0.000000e+00> : vector<32x16xf32>
    %77 = tpu.matmul %76, %73, %cst_31 {dimension_numbers = #tpu.dot_dimension_numbers<[1], [1], [0], [0], [0, 0, 1, 0], [], []>} : vector<32x32xf32>, vector<16x32xf32>, vector<32x16xf32> -> vector<32x16xf32>
    %cst_32 = arith.constant dense<0xFF800000> : vector<32xf32>
    %78 = vector.multi_reduction <maximumf>, %77, %cst_32 [1] : vector<32x16xf32> to vector<32xf32>
    %79 = vector.shape_cast %78 : vector<32xf32> to vector<32x1xf32>
    %80 = vector.broadcast %79 : vector<32x1xf32> to vector<32x16xf32>
    %81 = arith.subf %77, %80 : vector<32x16xf32>
    %82 = math.exp %81 : vector<32x16xf32>
    %cst_33 = arith.constant dense<0.000000e+00> : vector<32xf32>
    %83 = vector.multi_reduction <add>, %82, %cst_33 [1] : vector<32x16xf32> to vector<32xf32>
    %84 = vector.shape_cast %83 : vector<32xf32> to vector<32x1xf32>
    %85 = vector.broadcast %84 : vector<32x1xf32> to vector<32x16xf32>
    %86 = arith.divf %82, %85 : vector<32x16xf32>
    %cst_34 = arith.constant dense<0.000000e+00> : vector<32x32xf32>
    %87 = tpu.matmul %86, %74, %cst_34 {dimension_numbers = #tpu.dot_dimension_numbers<[1], [0], [0], [1], [0, 0, 1, 1], [], []>} : vector<32x16xf32>, vector<16x32xf32>, vector<32x32xf32> -> vector<32x32xf32>
    %88 = arith.mulf %87, %14 : vector<32x32xf32>
    %89 = vector.extract_strided_slice %88 {offsets = [0, 0], sizes = [8, 32], strides = [1, 1]} : vector<32x32xf32> to vector<8x32xf32>
    %90 = vector.extract_strided_slice %88 {offsets = [8, 0], sizes = [8, 32], strides = [1, 1]} : vector<32x32xf32> to vector<8x32xf32>
    %91 = arith.addf %89, %90 : vector<8x32xf32>
    %92 = vector.extract_strided_slice %88 {offsets = [16, 0], sizes = [8, 32], strides = [1, 1]} : vector<32x32xf32> to vector<8x32xf32>
    %93 = arith.addf %91, %92 : vector<8x32xf32>
    %94 = vector.extract_strided_slice %88 {offsets = [24, 0], sizes = [8, 32], strides = [1, 1]} : vector<32x32xf32> to vector<8x32xf32>
    %95 = arith.addf %93, %94 : vector<8x32xf32>
    %c0_35 = arith.constant 0 : index
    %c0_36 = arith.constant 0 : index
    %96 = vector.load %arg6[%c0_35, %c0_36] : memref<32x32xf32, #tpu.memory_space<vmem>>, vector<32x32xf32>
    %cst_37 = arith.constant dense<0.000000e+00> : vector<8x32xf32>
    %97 = tpu.matmul %95, %96, %cst_37 {dimension_numbers = #tpu.dot_dimension_numbers<[1], [0], [0], [1], [0, 0, 1, 1], [], []>} : vector<8x32xf32>, vector<32x32xf32>, vector<8x32xf32> -> vector<8x32xf32>
    %98 = vector.shape_cast %9 : vector<32xf32> to vector<1x32xf32>
    %99 = vector.broadcast %98 : vector<1x32xf32> to vector<8x32xf32>
    %100 = arith.addf %97, %99 : vector<8x32xf32>
    %c0_38 = arith.constant 0 : index
    %c0_39 = arith.constant 0 : index
    %101 = vector.load %arg10[%c0_38, %c0_39] : memref<8x32xf32, #tpu.memory_space<vmem>>, vector<8x32xf32>
    tpu.vector_store %arg10[%c0_38, %c0_39], %100 {strides = array<i32>} : memref<8x32xf32, #tpu.memory_space<vmem>>, vector<8x32xf32>,
    return
  }
  func.func @transform_0(%arg0: i32) -> (i32, i32) {
    %c0_i32 = arith.constant 0 : i32
    %c0_i32_0 = arith.constant 0 : i32
    return %arg0, %c0_i32 : i32, i32
  }
  func.func @transform_1(%arg0: i32) -> (i32, i32) {
    %c0_i32 = arith.constant 0 : i32
    %c0_i32_0 = arith.constant 0 : i32
    %c0_i32_1 = arith.constant 0 : i32
    return %c0_i32, %c0_i32_0 : i32, i32
  }
  func.func @transform_2(%arg0: i32) -> (i32, i32) {
    %c0_i32 = arith.constant 0 : i32
    %c0_i32_0 = arith.constant 0 : i32
    %c0_i32_1 = arith.constant 0 : i32
    return %c0_i32, %c0_i32_0 : i32, i32
  }
  func.func @transform_3(%arg0: i32) -> (i32, i32) {
    %c0_i32 = arith.constant 0 : i32
    %c0_i32_0 = arith.constant 0 : i32
    %c0_i32_1 = arith.constant 0 : i32
    return %c0_i32, %c0_i32_0 : i32, i32
  }
  func.func @transform_4(%arg0: i32) -> (i32, i32) {
    %c0_i32 = arith.constant 0 : i32
    %c0_i32_0 = arith.constant 0 : i32
    %c0_i32_1 = arith.constant 0 : i32
    return %c0_i32, %c0_i32_0 : i32, i32
  }
  func.func @transform_5(%arg0: i32) -> (i32, i32) {
    %c0_i32 = arith.constant 0 : i32
    %c0_i32_0 = arith.constant 0 : i32
    %c0_i32_1 = arith.constant 0 : i32
    return %c0_i32, %c0_i32_0 : i32, i32
  }
  func.func @transform_6(%arg0: i32) -> (i32, i32) {
    %c0_i32 = arith.constant 0 : i32
    %c0_i32_0 = arith.constant 0 : i32
    %c0_i32_1 = arith.constant 0 : i32
    return %c0_i32, %c0_i32_0 : i32, i32
  }
  func.func @transform_7(%arg0: i32) -> (i32, i32) {
    %c0_i32 = arith.constant 0 : i32
    %c0_i32_0 = arith.constant 0 : i32
    %c0_i32_1 = arith.constant 0 : i32
    return %c0_i32, %c0_i32_0 : i32, i32
  }
  func.func @transform_8(%arg0: i32) -> (i32, i32) {
    %c0_i32 = arith.constant 0 : i32
    %c0_i32_0 = arith.constant 0 : i32
    %c0_i32_1 = arith.constant 0 : i32
    return %c0_i32, %c0_i32_0 : i32, i32
  }
  func.func @transform_9(%arg0: i32) -> (i32, i32) {
    %c0_i32 = arith.constant 0 : i32
    %c0_i32_0 = arith.constant 0 : i32
    return %arg0, %c0_i32 : i32, i32
  }
}

</mosaic_0001>

<llo_original>
// kernel: tpu_custom_call.1
$region0: #{tpu_custom_call.1}
  #allocation0 [shape = 'u32[]', space=smem, size = 0x4, offset = 0x4, fixed_abs, tag = 'smem constant byte address 0x4 - core index']
  #allocation1 [shape = 'u32[144,128]{1,0:T(1,128)}', space=vmem, size = 0x12000, scoped, tag = 'internal scratch']
  %s0 = inlined_call_operand.vmem [shape: f32[32,16], index: 0, kind: input, shape index: {}]
  %s1 = inlined_call_operand.hbm [shape: f32[8,32], index: 1, kind: input, shape index: {}]
  %s2 = inlined_call_operand.vmem [shape: f32[32,32], index: 2, kind: input, shape index: {}]
  %s3 = inlined_call_operand.vmem [shape: f32[16,64], index: 3, kind: input, shape index: {}]
  %s4 = inlined_call_operand.vmem [shape: f32[1,64], index: 4, kind: input, shape index: {}]
  %s5 = inlined_call_operand.hbm [shape: f32[32,32], index: 5, kind: input, shape index: {}]
  %s6 = inlined_call_operand.hbm [shape: f32[32,32], index: 6, kind: input, shape index: {}]
  %s7 = inlined_call_operand.vmem [shape: f32[4,32], index: 7, kind: input, shape index: {}]
  %s8 = inlined_call_operand.vmem [shape: f32[2,16], index: 8, kind: input, shape index: {}]
  %s9 = inlined_call_operand.hbm [shape: f32[16,32], index: 9, kind: output, shape index: {}]
  %s10 = sld [smem:[#allocation0]]
  $region81: #{tpu_custom_call.1} parent=0
    _
  %s12 = ssub.s32 1, %s10
  %s13 = scalar_select 0, %s12, %s10
  $region1: #{tpu_custom_call.1} parent=0
    #allocation2 [shape = 'u8[4096]{0}', space=vmem, size = 0x1000, scoped, tag = 'input window, operand 1, single buffered']
    #allocation3 [shape = 's32[2]{0}', space=sflag, size = 0x8, scoped, tag = 'scoped memory for tpu_custom_call.1']
    #allocation4 [shape = 's32[2]{0}', space=sflag, size = 0x8, scoped, tag = 'scoped memory for tpu_custom_call.1']
    #allocation5 [shape = 'u8[16384]{0}', space=vmem, size = 0x4000, scoped, tag = 'input window, operand 5, single buffered']
    #allocation6 [shape = 's32[1]{0}', space=sflag, size = 0x4, scoped, tag = 'scoped memory for tpu_custom_call.1']
    #allocation7 [shape = 'u8[16384]{0}', space=vmem, size = 0x4000, scoped, tag = 'input window, operand 6, single buffered']
    #allocation8 [shape = 'u8[8192]{0}', space=vmem, size = 0x2000, scoped, tag = 'output window, operand 0']
    %14 = vsyncpa [#allocation3], 0
    %15 = vsyncpa [#allocation6], 0
    %16 = vsyncpa [#allocation4], 0
    %s17 = scalar_lea.sflag [#allocation4], 1
    %18 = vsyncpa %s17, 0
    loop: start=0, step=1, limit=4
    $region2: #{tpu_custom_call.1} parent=1 // loop_pre_header
      _
    $region3: #{tpu_custom_call.1} parent=1 // loop_header
      %s20 = sphi 0, %s24
      %p21 = scmp.ge.s32.totalorder %s20, 4
      %s30 = sphi 0, %s32
      %s33 = sphi 0, %s30
      %s34 = sphi 0, %s33
      %s50 = sphi 0, %s34
      %s54 = sphi 0, %s54
      %s56 = sphi 0, %s54
      %s57 = sphi 0, %s56
      %s71 = sphi 0, %s57
      %s75 = sphi 0, %s75
      %s77 = sphi 0, %s75
      %s78 = sphi 0, %s77
      %s92 = sphi 0, %s78
      %s96 = sphi 0, %s96
      %s98 = sphi 0, %s96
      %s99 = sphi 0, %s98
      %s113 = sphi 0, %s99
      %s117 = sphi 0, %s117
      %s119 = sphi 0, %s117
      %s120 = sphi 0, %s119
      %s134 = sphi 0, %s120
      %s138 = sphi 0, %s138
      %s140 = sphi 0, %s138
      %s141 = sphi 0, %s140
      %s155 = sphi 0, %s141
      %s159 = sphi 0, %s159
      %s161 = sphi 0, %s159
      %s162 = sphi 0, %s161
      %s176 = sphi 0, %s162
      %s180 = sphi 0, %s180
      %s182 = sphi 0, %s180
      %s183 = sphi 0, %s182
      %s197 = sphi 0, %s183
      %s201 = sphi 0, %s201
      %s203 = sphi 0, %s201
      %s204 = sphi 0, %s203
      %s218 = sphi 0, %s204
      %s224 = sphi 0, %s226
      %s227 = sphi 0, %s224
      %s228 = sphi 0, %s227
      %s244 = sphi 0, %s228
    $region4: #{tpu_custom_call.1} parent=1 // loop_header_branch
      %23 = sbr.rel (%p21) target = $region8
    $region5: #{tpu_custom_call.1} parent=1 // loop_body
      %s25 = ssub.s32 %s20, 1
      %s26 = ssub.s32 %s20, 2
      %s27 = sadd.s32 %s20, 1
      %s28 = ssub.s32 %s20, %s27
      %p29 = scmp.eq.s32.totalorder %s28, 0
      %s31 = sadd.s32 %s30, 1
      %s32 = scalar_select %p29, %s30, %s31
      %p35 = pneg %p29
      %p36 = scmp.eq.s32.totalorder %s20, 1
      %p37 = por %p35, %p36
      %p38 = scmp.ne.s32.totalorder %s30, %s33
      %p39 = scmp.eq.s32.totalorder %s20, 0
      %p40 = por %p38, %p39
      %p41 = scmp.ne.s32.totalorder %s30, %s33
      %p42 = scmp.eq.s32.totalorder %s25, 1
      %p43 = por %p41, %p42
      %p44 = scmp.ne.s32.totalorder %s33, %s34
      %p45 = scmp.eq.s32.totalorder %s25, 0
      %p46 = por %p44, %p45
      %p47 = scmp.ne.s32.totalorder %s33, %s34
      %p48 = scmp.eq.s32.totalorder %s26, 1
      %p49 = por %p47, %p48
      %p51 = scmp.ne.s32.totalorder %s34, %s50
      %p52 = scmp.eq.s32.totalorder %s26, 0
      %p53 = por %p51, %p52
      %s55 = sadd.s32 %s54, 1
      %p58 = scmp.eq.s32.totalorder %s20, 1
      %p59 = scmp.ne.s32.totalorder %s54, %s56
      %p60 = scmp.eq.s32.totalorder %s20, 0
      %p61 = por %p59, %p60
      %p62 = scmp.ne.s32.totalorder %s54, %s56
      %p63 = scmp.eq.s32.totalorder %s25, 1
      %p64 = por %p62, %p63
      %p65 = scmp.ne.s32.totalorder %s56, %s57
      %p66 = scmp.eq.s32.totalorder %s25, 0
      %p67 = por %p65, %p66
      %p68 = scmp.ne.s32.totalorder %s56, %s57
      %p69 = scmp.eq.s32.totalorder %s26, 1
      %p70 = por %p68, %p69
      %p72 = scmp.ne.s32.totalorder %s57, %s71
      %p73 = scmp.eq.s32.totalorder %s26, 0
      %p74 = por %p72, %p73
      %s76 = sadd.s32 %s75, 1
      %p79 = scmp.eq.s32.totalorder %s20, 1
      %p80 = scmp.ne.s32.totalorder %s75, %s77
      %p81 = scmp.eq.s32.totalorder %s20, 0
      %p82 = por %p80, %p81
      %p83 = scmp.ne.s32.totalorder %s75, %s77
      %p84 = scmp.eq.s32.totalorder %s25, 1
      %p85 = por %p83, %p84
      %p86 = scmp.ne.s32.totalorder %s77, %s78
      %p87 = scmp.eq.s32.totalorder %s25, 0
      %p88 = por %p86, %p87
      %p89 = scmp.ne.s32.totalorder %s77, %s78
      %p90 = scmp.eq.s32.totalorder %s26, 1
      %p91 = por %p89, %p90
      %p93 = scmp.ne.s32.totalorder %s78, %s92
      %p94 = scmp.eq.s32.totalorder %s26, 0
      %p95 = por %p93, %p94
      %s97 = sadd.s32 %s96, 1
      %p100 = scmp.eq.s32.totalorder %s20, 1
      %p101 = scmp.ne.s32.totalorder %s96, %s98
      %p102 = scmp.eq.s32.totalorder %s20, 0
      %p103 = por %p101, %p102
      %p104 = scmp.ne.s32.totalorder %s96, %s98
      %p105 = scmp.eq.s32.totalorder %s25, 1
      %p106 = por %p104, %p105
      %p107 = scmp.ne.s32.totalorder %s98, %s99
      %p108 = scmp.eq.s32.totalorder %s25, 0
      %p109 = por %p107, %p108
      %p110 = scmp.ne.s32.totalorder %s98, %s99
      %p111 = scmp.eq.s32.totalorder %s26, 1
      %p112 = por %p110, %p111
      %p114 = scmp.ne.s32.totalorder %s99, %s113
      %p115 = scmp.eq.s32.totalorder %s26, 0
      %p116 = por %p114, %p115
      %s118 = sadd.s32 %s117, 1
      %p121 = scmp.eq.s32.totalorder %s20, 1
      %p122 = scmp.ne.s32.totalorder %s117, %s119
      %p123 = scmp.eq.s32.totalorder %s20, 0
      %p124 = por %p122, %p123
      %p125 = scmp.ne.s32.totalorder %s117, %s119
      %p126 = scmp.eq.s32.totalorder %s25, 1
      %p127 = por %p125, %p126
      %p128 = scmp.ne.s32.totalorder %s119, %s120
      %p129 = scmp.eq.s32.totalorder %s25, 0
      %p130 = por %p128, %p129
      %p131 = scmp.ne.s32.totalorder %s119, %s120
      %p132 = scmp.eq.s32.totalorder %s26, 1
      %p133 = por %p131, %p132
      %p135 = scmp.ne.s32.totalorder %s120, %s134
      %p136 = scmp.eq.s32.totalorder %s26, 0
      %p137 = por %p135, %p136
      %s139 = sadd.s32 %s138, 1
      %p142 = scmp.eq.s32.totalorder %s20, 1
      %p143 = scmp.ne.s32.totalorder %s138, %s140
      %p144 = scmp.eq.s32.totalorder %s20, 0
      %p145 = por %p143, %p144
      %p146 = scmp.ne.s32.totalorder %s138, %s140
      %p147 = scmp.eq.s32.totalorder %s25, 1
      %p148 = por %p146, %p147
      %p149 = scmp.ne.s32.totalorder %s140, %s141
      %p150 = scmp.eq.s32.totalorder %s25, 0
      %p151 = por %p149, %p150
      %p152 = scmp.ne.s32.totalorder %s140, %s141
      %p153 = scmp.eq.s32.totalorder %s26, 1
      %p154 = por %p152, %p153
      %p156 = scmp.ne.s32.totalorder %s141, %s155
      %p157 = scmp.eq.s32.totalorder %s26, 0
      %p158 = por %p156, %p157
      %s160 = sadd.s32 %s159, 1
      %p163 = scmp.eq.s32.totalorder %s20, 1
      %p164 = scmp.ne.s32.totalorder %s159, %s161
      %p165 = scmp.eq.s32.totalorder %s20, 0
      %p166 = por %p164, %p165
      %p167 = scmp.ne.s32.totalorder %s159, %s161
      %p168 = scmp.eq.s32.totalorder %s25, 1
      %p169 = por %p167, %p168
      %p170 = scmp.ne.s32.totalorder %s161, %s162
      %p171 = scmp.eq.s32.totalorder %s25, 0
      %p172 = por %p170, %p171
      %p173 = scmp.ne.s32.totalorder %s161, %s162
      %p174 = scmp.eq.s32.totalorder %s26, 1
      %p175 = por %p173, %p174
      %p177 = scmp.ne.s32.totalorder %s162, %s176
      %p178 = scmp.eq.s32.totalorder %s26, 0
      %p179 = por %p177, %p178
      %s181 = sadd.s32 %s180, 1
      %p184 = scmp.eq.s32.totalorder %s20, 1
      %p185 = scmp.ne.s32.totalorder %s180, %s182
      %p186 = scmp.eq.s32.totalorder %s20, 0
      %p187 = por %p185, %p186
      %p188 = scmp.ne.s32.totalorder %s180, %s182
      %p189 = scmp.eq.s32.totalorder %s25, 1
      %p190 = por %p188, %p189
      %p191 = scmp.ne.s32.totalorder %s182, %s183
      %p192 = scmp.eq.s32.totalorder %s25, 0
      %p193 = por %p191, %p192
      %p194 = scmp.ne.s32.totalorder %s182, %s183
      %p195 = scmp.eq.s32.totalorder %s26, 1
      %p196 = por %p194, %p195
      %p198 = scmp.ne.s32.totalorder %s183, %s197
      %p199 = scmp.eq.s32.totalorder %s26, 0
      %p200 = por %p198, %p199
      %s202 = sadd.s32 %s201, 1
      %p205 = scmp.eq.s32.totalorder %s20, 1
      %p206 = scmp.ne.s32.totalorder %s201, %s203
      %p207 = scmp.eq.s32.totalorder %s20, 0
      %p208 = por %p206, %p207
      %p209 = scmp.ne.s32.totalorder %s201, %s203
      %p210 = scmp.eq.s32.totalorder %s25, 1
      %p211 = por %p209, %p210
      %p212 = scmp.ne.s32.totalorder %s203, %s204
      %p213 = scmp.eq.s32.totalorder %s25, 0
      %p214 = por %p212, %p213
      %p215 = scmp.ne.s32.totalorder %s203, %s204
      %p216 = scmp.eq.s32.totalorder %s26, 1
      %p217 = por %p215, %p216
      %p219 = scmp.ne.s32.totalorder %s204, %s218
      %p220 = scmp.eq.s32.totalorder %s26, 0
      %p221 = por %p219, %p220
      %s222 = ssub.s32 %s20, %s27
      %p223 = scmp.eq.s32.totalorder %s222, 0
      %s225 = sadd.s32 %s224, 1
      %s226 = scalar_select %p223, %s224, %s225
      %p229 = pneg %p223
      %p230 = scmp.eq.s32.totalorder %s20, 1
      %p231 = por %p229, %p230
      %p232 = scmp.ne.s32.totalorder %s224, %s227
      %p233 = scmp.eq.s32.totalorder %s20, 0
      %p234 = por %p232, %p233
      %p235 = scmp.ne.s32.totalorder %s224, %s227
      %p236 = scmp.eq.s32.totalorder %s25, 1
      %p237 = por %p235, %p236
      %p238 = scmp.ne.s32.totalorder %s227, %s228
      %p239 = scmp.eq.s32.totalorder %s25, 0
      %p240 = por %p238, %p239
      %p241 = scmp.ne.s32.totalorder %s227, %s228
      %p242 = scmp.eq.s32.totalorder %s26, 1
      %p243 = por %p241, %p242
      %p245 = scmp.ne.s32.totalorder %s228, %s244
      %p246 = scmp.eq.s32.totalorder %s26, 0
      %p247 = por %p245, %p246
      %p248 = scmp.le.s32.totalorder 1, %s20
      %p249 = scmp.lt.s32.totalorder %s20, 3
      %p250 = pnand %p248, %p249
      %p251 = pneg %p250
      // Predicated region
      $region9: #{tpu_custom_call.1} parent=5 // pred_check
        _
      $region10: #{tpu_custom_call.1} parent=5 // pred_check_branch
        %253 = sbr.rel (%p250) target = $region12
      $region11: #{tpu_custom_call.1} parent=5 // pred_region
        %s254 = ssub.s32 %s20, 1
        // Predicated region
        $region13: #{tpu_custom_call.1} parent=11 // pred_check
          %p255 = pneg %p67
        $region14: #{tpu_custom_call.1} parent=11 // pred_check_branch
          %257 = sbr.rel (%p255) target = $region16
        $region15: #{tpu_custom_call.1} parent=11 // pred_region
          %s259 = ssub.s32 128, 128
          %260 = vsyncadd [#allocation3], %s259
          %s262 = sshll.u32 [#allocation2], 4
          %s263 = int_to_ptr.vmem [resolvable:$true] %s262
          %265 = dma.hbm_to_vmem [thread:$0]  %s1, 128, %s263, [#allocation3]
        $region16: #{tpu_custom_call.1} parent=11 // pred_fallthru
          _
        // Predicated region
        $region17: #{tpu_custom_call.1} parent=11 // pred_check
          %p266 = pneg %p88
        $region18: #{tpu_custom_call.1} parent=11 // pred_check_branch
          %268 = sbr.rel (%p266) target = $region20
        $region19: #{tpu_custom_call.1} parent=11 // pred_region
          _
        $region20: #{tpu_custom_call.1} parent=11 // pred_fallthru
          _
        // Predicated region
        $region21: #{tpu_custom_call.1} parent=11 // pred_check
          %p269 = pneg %p109
        $region22: #{tpu_custom_call.1} parent=11 // pred_check_branch
          %271 = sbr.rel (%p269) target = $region24
        $region23: #{tpu_custom_call.1} parent=11 // pred_region
          _
        $region24: #{tpu_custom_call.1} parent=11 // pred_fallthru
          _
        // Predicated region
        $region25: #{tpu_custom_call.1} parent=11 // pred_check
          %p272 = pneg %p130
        $region26: #{tpu_custom_call.1} parent=11 // pred_check_branch
          %274 = sbr.rel (%p272) target = $region28
        $region27: #{tpu_custom_call.1} parent=11 // pred_region
          _
        $region28: #{tpu_custom_call.1} parent=11 // pred_fallthru
          _
        // Predicated region
        $region29: #{tpu_custom_call.1} parent=11 // pred_check
          %p275 = pneg %p151
        $region30: #{tpu_custom_call.1} parent=11 // pred_check_branch
          %277 = sbr.rel (%p275) target = $region32
        $region31: #{tpu_custom_call.1} parent=11 // pred_region
          %s279 = ssub.s32 512, 512
          %280 = vsyncadd [#allocation6], %s279
          %s281 = sshll.u32 [#allocation5], 4
          %s282 = int_to_ptr.vmem [resolvable:$true] %s281
          %287 = dma.hbm_to_vmem [thread:$0]  %s5, 512, %s282, [#allocation6], 128, 128, 8
        $region32: #{tpu_custom_call.1} parent=11 // pred_fallthru
          _
        // Predicated region
        $region33: #{tpu_custom_call.1} parent=11 // pred_check
          %p288 = pneg %p172
        $region34: #{tpu_custom_call.1} parent=11 // pred_check_branch
          %290 = sbr.rel (%p288) target = $region36
        $region35: #{tpu_custom_call.1} parent=11 // pred_region
          %s292 = ssub.s32 512, 512
          %293 = vsyncadd [#allocation6], %s292
          %s294 = sshll.u32 [#allocation7], 4
          %s295 = int_to_ptr.vmem [resolvable:$true] %s294
          %300 = dma.hbm_to_vmem [thread:$0]  %s6, 512, %s295, [#allocation6], 128, 128, 8
        $region36: #{tpu_custom_call.1} parent=11 // pred_fallthru
          _
        // Predicated region
        $region37: #{tpu_custom_call.1} parent=11 // pred_check
          %p301 = pneg %p193
        $region38: #{tpu_custom_call.1} parent=11 // pred_check_branch
          %303 = sbr.rel (%p301) target = $region40
        $region39: #{tpu_custom_call.1} parent=11 // pred_region
          _
        $region40: #{tpu_custom_call.1} parent=11 // pred_fallthru
          _
        // Predicated region
        $region41: #{tpu_custom_call.1} parent=11 // pred_check
          %p304 = pneg %p214
        $region42: #{tpu_custom_call.1} parent=11 // pred_check_branch
          %306 = sbr.rel (%p304) target = $region44
        $region43: #{tpu_custom_call.1} parent=11 // pred_region
          _
        $region44: #{tpu_custom_call.1} parent=11 // pred_fallthru
          _
      $region12: #{tpu_custom_call.1} parent=5 // pred_fallthru
        _
      %p307 = scmp.lt.s32.totalorder %s20, 2
      // Predicated region
      $region45: #{tpu_custom_call.1} parent=5 // pred_check
        %p308 = pneg %p307
      $region46: #{tpu_custom_call.1} parent=5 // pred_check_branch
        %310 = sbr.rel (%p308) target = $region48
      $region47: #{tpu_custom_call.1} parent=5 // pred_region
        // Predicated region
        $region49: #{tpu_custom_call.1} parent=47 // pred_check
          %p311 = pneg %p40
        $region50: #{tpu_custom_call.1} parent=47 // pred_check_branch
          %313 = sbr.rel (%p311) target = $region52
        $region51: #{tpu_custom_call.1} parent=47 // pred_region
          %s314 = smul.u32 2, %s20
          %p315 = scmp.lt.s32.totalorder %s314, 3
          %s316 = scalar_select %p315, %s314, 3
          %s317 = smul.addr %s316, 8
          %s318 = scalar_lea.vmem %s0, %s317
          %s319 = smul.u32 2, %s20
        $region52: #{tpu_custom_call.1} parent=47 // pred_fallthru
          _
      $region48: #{tpu_custom_call.1} parent=5 // pred_fallthru
        _
      %p320 = scmp.le.s32.totalorder 1, %s20
      %p321 = scmp.lt.s32.totalorder %s20, 3
      %p322 = pnand %p320, %p321
      %p323 = pneg %p322
      // Predicated region
      $region53: #{tpu_custom_call.1} parent=5 // pred_check
        _
      $region54: #{tpu_custom_call.1} parent=5 // pred_check_branch
        %325 = sbr.rel (%p322) target = $region56
      $region55: #{tpu_custom_call.1} parent=5 // pred_region
        %s326 = ssub.s32 %s20, 1
        // Predicated region
        $region57: #{tpu_custom_call.1} parent=55 // pred_check
          %p327 = pneg %p67
        $region58: #{tpu_custom_call.1} parent=55 // pred_check_branch
          %329 = sbr.rel (%p327) target = $region60
        $region59: #{tpu_custom_call.1} parent=55 // pred_region
          %330 = dma.done [#allocation3], 128
        $region60: #{tpu_custom_call.1} parent=55 // pred_fallthru
          _
        // Predicated region
        $region61: #{tpu_custom_call.1} parent=55 // pred_check
          %p331 = pneg %p151
        $region62: #{tpu_custom_call.1} parent=55 // pred_check_branch
          %333 = sbr.rel (%p331) target = $region64
        $region63: #{tpu_custom_call.1} parent=55 // pred_region
          %334 = dma.done [#allocation6], 512
        $region64: #{tpu_custom_call.1} parent=55 // pred_fallthru
          _
        // Predicated region
        $region65: #{tpu_custom_call.1} parent=55 // pred_check
          %p335 = pneg %p172
        $region66: #{tpu_custom_call.1} parent=55 // pred_check_branch
          %337 = sbr.rel (%p335) target = $region68
        $region67: #{tpu_custom_call.1} parent=55 // pred_region
          %338 = dma.done [#allocation6], 512
        $region68: #{tpu_custom_call.1} parent=55 // pred_fallthru
          _
        %s339 = smul.u32 2, %s25
        %p340 = scmp.lt.s32.totalorder %s339, 3
        %s341 = scalar_select %p340, %s339, 3
        %s342 = smul.addr %s341, 8
        %s343 = scalar_lea.vmem %s0, %s342
        %p344 = pneg %p46
        %p345 = pneg %p43
        %p346 = pneg %p67
        %p347 = pneg %p64
        %p348 = pneg %p88
        %p349 = pneg %p85
        %p350 = pneg %p109
        %p351 = pneg %p106
        %p352 = pneg %p130
        %p353 = pneg %p127
        %p354 = pneg %p151
        %p355 = pneg %p148
        %p356 = pneg %p172
        %p357 = pneg %p169
        %p358 = pneg %p193
        %p359 = pneg %p190
        %p360 = pneg %p214
        %p361 = pneg %p211
        %p362 = pneg %p240
        %p363 = pneg %p237
        %s364 = sand.u32 %s227, 1
        %s365 = scalar_lea.sflag [#allocation4], %s364
        %s366 = sand.u32 %s227, 1
        %s367 = smul.addr %s366, 8
        %s368 = scalar_lea.vmem [#allocation8], %s367
        %s369 = smul.u32 2, %s25
        %p370 = scmp.lt.s32.totalorder %s369, 3
        %s371 = scalar_select %p370, %s369, 3
        %s372 = smul.addr %s371, 8
        %s373 = scalar_lea.vmem %s0, %s372
        %s374 = smul.u32 2, %s25
        %v375 = vld [vmem:[%s373] sm:$0xff]
        %v376 = vld [vmem:[%s373 + $0x8] sm:$0xff]
        %v377 = vld [vmem:[#allocation2] sm:$0xff]
        %v378 = vld [vmem:[%s7] sm:$0x1]
        %v379 = vld [vmem:[%s7 + $0x1] sm:$0x1]
        %v380 = vld [vmem:[%s7 + $0x2] sm:$0x1]
        %v381 = vld [vmem:[%s7 + $0x3] sm:$0x1]
        %v382 = vld [vmem:[%s8] sm:$0x1]
        %v383 = vld [vmem:[%s8 + $0x1] sm:$0x1]
        %v384 = vld [vmem:[#allocation7] sm:$0xff]
        %v385 = vld [vmem:[#allocation7 + $0x8] sm:$0xff]
        %v386 = vld [vmem:[#allocation7 + $0x10] sm:$0xff]
        %v387 = vld [vmem:[#allocation7 + $0x18] sm:$0xff]
        %vm388 = vcmask 130048
        %v389 = vsel %vm388, %v375, 0.0
        %390 = vadd.xlane.f32.xlu0 %v389
        %v391 = vpop.xlane.xlu0 %390
        %v392 = vsel %vm388, %v376, 0.0
        %393 = vadd.xlane.f32.xlu0 %v392
        %v394 = vpop.xlane.xlu0 %393
        %v395 = vrcp.pop 16.0
        %v396 = vmul.f32 %v391, %v395
        %v397 = vmul.f32 %v394, %v395
        %v398 = vsub.f32 %v375, %v396
        %v399 = vsub.f32 %v376, %v397
        %v400 = vmul.f32 %v398, %v398
        %v401 = vmul.f32 %v399, %v399
        %v402 = vsel %vm388, %v400, 0.0
        %403 = vadd.xlane.f32.xlu0 %v402
        %v404 = vpop.xlane.xlu0 %403
        %v405 = vsel %vm388, %v401, 0.0
        %406 = vadd.xlane.f32.xlu0 %v405
        %v407 = vpop.xlane.xlu0 %406
        %v408 = vmul.f32 %v404, %v395
        %v409 = vmul.f32 %v407, %v395
        %v410 = vadd.f32 %v408, 1e-05
        %v411 = vadd.f32 %v409, 1e-05
        %v412 = vrsqrt.pop %v410
        %v413 = vrsqrt.pop %v411
        %v414 = vmul.f32 %v398, %v412
        %v415 = vmul.f32 %v399, %v413
        %v416 = vlaneseq
        %v417 = vshrl.u32 %v416, 7
        %v418 = vsub.s32 0, %v417
        %v419 = vrot.slane %v382, %v418
        %v420 = vmul.f32 %v414, %v419
        %v421 = vmul.f32 %v415, %v419
        %v422 = vlaneseq
        %v423 = vshrl.u32 %v422, 7
        %v424 = vsub.s32 0, %v423
        %v425 = vrot.slane %v383, %v424
        %v426 = vadd.f32 %v420, %v425
        %v427 = vadd.f32 %v421, %v425
        %vm428 = vcmask 261120
        %v429 = vsel %vm428, %v377, 0.0
        %430 = vadd.xlane.f32.xlu0 %v429
        %v431 = vpop.xlane.xlu0 %430
        %v432 = vrcp.pop 32.0
        %v433 = vmul.f32 %v431, %v432
        %v434 = vsub.f32 %v377, %v433
        %v435 = vmul.f32 %v434, %v434
        %v436 = vsel %vm428, %v435, 0.0
        %437 = vadd.xlane.f32.xlu0 %v436
        %v438 = vpop.xlane.xlu0 %437
        %v439 = vmul.f32 %v438, %v432
        %v440 = vadd.f32 %v439, 1e-05
        %v441 = vrsqrt.pop %v440
        %v442 = vmul.f32 %v434, %v441
        %v443 = vlaneseq
        %v444 = vshrl.u32 %v443, 7
        %v445 = vsub.s32 0, %v444
        %v446 = vrot.slane %v378, %v445
        %v447 = vmul.f32 %v442, %v446
        %v448 = vlaneseq
        %v449 = vshrl.u32 %v448, 7
        %v450 = vsub.s32 0, %v449
        %v451 = vrot.slane %v379, %v450
        %v452 = vadd.f32 %v447, %v451
        %v453 = vld [vmem:[%s2] sm:$0xff]
        %v454 = vld [vmem:[%s2 + $0x8] sm:$0xff]
        %v455 = vld [vmem:[%s2 + $0x10] sm:$0xff]
        %v456 = vld [vmem:[%s2 + $0x18] sm:$0xff]
        %v457 = vlaneseq
        %v458 = vshrl.u32 %v457, 7
        %v459 = vsub.s32 0, %v458
        %v460 = vrot.slane %v380, %v459
        %v462 = vsel %vm428, %v452, 0
        %464 = vmatprep.subr.mxu0 0.0
        %465 = vmatpush1.msra.mxu0 0.0
        %466 = vmatprep.subr.mxu0 0.0
        %467 = vmatpush1.msra.mxu0 0.0
        %468 = vmatprep.subr.mxu0 0.0
        %469 = vmatpush1.msra.mxu0 0.0
        %470 = vmatprep.subr.mxu0 0.0
        %471 = vmatpush1.msra.mxu0 0.0
        %472 = vmatprep.subr.mxu0 0.0
        %473 = vmatpush1.msra.mxu0 0.0
        %474 = vmatprep.subr.mxu0 0.0
        %475 = vmatpush1.msra.mxu0 0.0
        %476 = vmatprep.subr.mxu0 0.0
        %477 = vmatpush1.msra.mxu0 0.0
        %478 = vmatprep.subr.mxu0 0.0
        %479 = vmatpush1.msra.mxu0 0.0
        %480 = vmatprep.subr.mxu0 0.0
        %481 = vmatpush1.msra.mxu0 0.0
        %482 = vmatprep.subr.mxu0 0.0
        %483 = vmatpush1.msra.mxu0 0.0
        %484 = vmatprep.subr.mxu0 0.0
        %485 = vmatpush1.msra.mxu0 0.0
        %486 = vmatprep.subr.mxu0 0.0
        %487 = vmatpush1.msra.mxu0 0.0
        %488 = vmatprep.subr.mxu0 0.0
        %489 = vmatpush1.msra.mxu0 %v456
        %490 = vmatprep.subr.mxu0 0.0
        %491 = vmatpush1.msra.mxu0 %v455
        %492 = vmatprep.subr.mxu0 0.0
        %493 = vmatpush1.msra.mxu0 %v454
        %494 = vmatprep.subr.mxu0 0.0
        %495 = vmatpush1.msra.mxu0 %v453
        %496 = vmatprep.subr.mxu0 0.0
        %497 = vmatpush2.msra.mxu0 0.0
        %498 = vmatprep.subr.mxu0 0.0
        %499 = vmatpush2.msra.mxu0 0.0
        %500 = vmatprep.subr.mxu0 0.0
        %501 = vmatpush2.msra.mxu0 0.0
        %502 = vmatprep.subr.mxu0 0.0
        %503 = vmatpush2.msra.mxu0 0.0
        %504 = vmatprep.subr.mxu0 0.0
        %505 = vmatpush2.msra.mxu0 0.0
        %506 = vmatprep.subr.mxu0 0.0
        %507 = vmatpush2.msra.mxu0 0.0
        %508 = vmatprep.subr.mxu0 0.0
        %509 = vmatpush2.msra.mxu0 0.0
        %510 = vmatprep.subr.mxu0 0.0
        %511 = vmatpush2.msra.mxu0 0.0
        %512 = vmatprep.subr.mxu0 0.0
        %513 = vmatpush2.msra.mxu0 0.0
        %514 = vmatprep.subr.mxu0 0.0
        %515 = vmatpush2.msra.mxu0 0.0
        %516 = vmatprep.subr.mxu0 0.0
        %517 = vmatpush2.msra.mxu0 0.0
        %518 = vmatprep.subr.mxu0 0.0
        %519 = vmatpush2.msra.mxu0 0.0
        %520 = vmatprep.subr.mxu0 0.0
        %521 = vmatpush2.msra.mxu0 0.0
        %522 = vmatprep.subr.mxu0 0.0
        %523 = vmatpush2.msra.mxu0 0.0
        %524 = vmatprep.subr.mxu0 0.0
        %525 = vmatpush2.msra.mxu0 0.0
        %526 = vmatprep.subr.mxu0 0.0
        %527 = vmatpush2.msra.mxu0 0.0
        %528 = vmatprep.mubr.f32.mxu0 0.0
        %529 = vmatmul.mubr.f32.gmra.mxu0 %v462
        %v530 = vpop.f32.mrf.mxu0
        %v531 = vadd.f32 %v460, %v530
        %v532 = vpop.f32.mrf.mxu0
        %533 = vdwg.mxu0
        %v534 = vld [vmem:[%s3] sm:$0xff]
        %v535 = vld [vmem:[%s3 + $0x8] sm:$0xff]
        %v536 = vld [vmem:[%s4] sm:$0x1]
        %v538 = vlaneseq
        %v539 = vshrl.u32 %v538, 7
        %v540 = vsub.s32 0, %v539
        %v541 = vrot.slane %v536, %v540
        %v544 = vsel %vm388, %v426, 0
        %v547 = vsel %vm388, %v427, 0
        %549 = vmatprep.subr.mxu0 0.0
        %550 = vmatpush1.msra.mxu0 0.0
        %551 = vmatprep.subr.mxu0 0.0
        %552 = vmatpush1.msra.mxu0 0.0
        %553 = vmatprep.subr.mxu0 0.0
        %554 = vmatpush1.msra.mxu0 0.0
        %555 = vmatprep.subr.mxu0 0.0
        %556 = vmatpush1.msra.mxu0 0.0
        %557 = vmatprep.subr.mxu0 0.0
        %558 = vmatpush1.msra.mxu0 0.0
        %559 = vmatprep.subr.mxu0 0.0
        %560 = vmatpush1.msra.mxu0 0.0
        %561 = vmatprep.subr.mxu0 0.0
        %562 = vmatpush1.msra.mxu0 0.0
        %563 = vmatprep.subr.mxu0 0.0
        %564 = vmatpush1.msra.mxu0 0.0
        %565 = vmatprep.subr.mxu0 0.0
        %566 = vmatpush1.msra.mxu0 0.0
        %567 = vmatprep.subr.mxu0 0.0
        %568 = vmatpush1.msra.mxu0 0.0
        %569 = vmatprep.subr.mxu0 0.0
        %570 = vmatpush1.msra.mxu0 0.0
        %571 = vmatprep.subr.mxu0 0.0
        %572 = vmatpush1.msra.mxu0 0.0
        %573 = vmatprep.subr.mxu0 0.0
        %574 = vmatpush1.msra.mxu0 0.0
        %575 = vmatprep.subr.mxu0 0.0
        %576 = vmatpush1.msra.mxu0 0.0
        %577 = vmatprep.subr.mxu0 0.0
        %578 = vmatpush1.msra.mxu0 %v535
        %579 = vmatprep.subr.mxu0 0.0
        %580 = vmatpush1.msra.mxu0 %v534
        %581 = vmatprep.subr.mxu0 0.0
        %582 = vmatpush2.msra.mxu0 0.0
        %583 = vmatprep.subr.mxu0 0.0
        %584 = vmatpush2.msra.mxu0 0.0
        %585 = vmatprep.subr.mxu0 0.0
        %586 = vmatpush2.msra.mxu0 0.0
        %587 = vmatprep.subr.mxu0 0.0
        %588 = vmatpush2.msra.mxu0 0.0
        %589 = vmatprep.subr.mxu0 0.0
        %590 = vmatpush2.msra.mxu0 0.0
        %591 = vmatprep.subr.mxu0 0.0
        %592 = vmatpush2.msra.mxu0 0.0
        %593 = vmatprep.subr.mxu0 0.0
        %594 = vmatpush2.msra.mxu0 0.0
        %595 = vmatprep.subr.mxu0 0.0
        %596 = vmatpush2.msra.mxu0 0.0
        %597 = vmatprep.subr.mxu0 0.0
        %598 = vmatpush2.msra.mxu0 0.0
        %599 = vmatprep.subr.mxu0 0.0
        %600 = vmatpush2.msra.mxu0 0.0
        %601 = vmatprep.subr.mxu0 0.0
        %602 = vmatpush2.msra.mxu0 0.0
        %603 = vmatprep.subr.mxu0 0.0
        %604 = vmatpush2.msra.mxu0 0.0
        %605 = vmatprep.subr.mxu0 0.0
        %606 = vmatpush2.msra.mxu0 0.0
        %607 = vmatprep.subr.mxu0 0.0
        %608 = vmatpush2.msra.mxu0 0.0
        %609 = vmatprep.subr.mxu0 0.0
        %610 = vmatpush2.msra.mxu0 0.0
        %611 = vmatprep.subr.mxu0 0.0
        %612 = vmatpush2.msra.mxu0 0.0
        %613 = vmatprep.mubr.f32.mxu0 0.0
        %614 = vmatmul.mubr.f32.gmra.mxu0 %v544
        %v615 = vpop.f32.mrf.mxu0
        %v616 = vadd.f32 %v541, %v615
        %v617 = vpop.f32.mrf.mxu0
        %618 = vmatprep.mubr.f32.mxu0 0.0
        %619 = vmatmul.mubr.f32.gmra.mxu0 %v547
        %v620 = vpop.f32.mrf.mxu0
        %v621 = vadd.f32 %v541, %v620
        %v622 = vpop.f32.mrf.mxu0
        %623 = vdwg.mxu0
        %v624 = vmul.f32 %v531, %v384
        %v625 = vmul.f32 %v531, %v385
        %v626 = vmul.f32 %v531, %v386
        %v627 = vmul.f32 %v531, %v387
        %v629 = vsel %vm428, %v624, 0
        %v632 = vsel %vm428, %v625, 0
        %v635 = vsel %vm428, %v626, 0
        %v638 = vsel %vm428, %v627, 0
        %v641 = vsel %vm428, %v616, 0
        %v644 = vsel %vm428, %v621, 0
        %646 = vmatprep.subr.mxu0 0.0
        %647 = vmatpush1.xpose.msra.mxu0 0.0
        %648 = vmatprep.subr.mxu0 0.0
        %649 = vmatpush1.xpose.msra.mxu0 0.0
        %650 = vmatprep.subr.mxu0 0.0
        %651 = vmatpush1.xpose.msra.mxu0 0.0
        %652 = vmatprep.subr.mxu0 0.0
        %653 = vmatpush1.xpose.msra.mxu0 0.0
        %654 = vmatprep.subr.mxu0 0.0
        %655 = vmatpush1.xpose.msra.mxu0 0.0
        %656 = vmatprep.subr.mxu0 0.0
        %657 = vmatpush1.xpose.msra.mxu0 0.0
        %658 = vmatprep.subr.mxu0 0.0
        %659 = vmatpush1.xpose.msra.mxu0 0.0
        %660 = vmatprep.subr.mxu0 0.0
        %661 = vmatpush1.xpose.msra.mxu0 0.0
        %662 = vmatprep.subr.mxu0 0.0
        %663 = vmatpush1.xpose.msra.mxu0 0.0
        %664 = vmatprep.subr.mxu0 0.0
        %665 = vmatpush1.xpose.msra.mxu0 0.0
        %666 = vmatprep.subr.mxu0 0.0
        %667 = vmatpush1.xpose.msra.mxu0 0.0
        %668 = vmatprep.subr.mxu0 0.0
        %669 = vmatpush1.xpose.msra.mxu0 0.0
        %670 = vmatprep.subr.mxu0 0.0
        %671 = vmatpush1.xpose.msra.mxu0 0.0
        %672 = vmatprep.subr.mxu0 0.0
        %673 = vmatpush1.xpose.msra.mxu0 0.0
        %674 = vmatprep.subr.mxu0 0.0
        %675 = vmatpush1.xpose.msra.mxu0 %v644
        %676 = vmatprep.subr.mxu0 0.0
        %677 = vmatpush1.xpose.msra.mxu0 %v641
        %678 = vmatprep.subr.mxu0 0.0
        %679 = vmatpush2.xpose.msra.mxu0 0.0
        %680 = vmatprep.subr.mxu0 0.0
        %681 = vmatpush2.xpose.msra.mxu0 0.0
        %682 = vmatprep.subr.mxu0 0.0
        %683 = vmatpush2.xpose.msra.mxu0 0.0
        %684 = vmatprep.subr.mxu0 0.0
        %685 = vmatpush2.xpose.msra.mxu0 0.0
        %686 = vmatprep.subr.mxu0 0.0
        %687 = vmatpush2.xpose.msra.mxu0 0.0
        %688 = vmatprep.subr.mxu0 0.0
        %689 = vmatpush2.xpose.msra.mxu0 0.0
        %690 = vmatprep.subr.mxu0 0.0
        %691 = vmatpush2.xpose.msra.mxu0 0.0
        %692 = vmatprep.subr.mxu0 0.0
        %693 = vmatpush2.xpose.msra.mxu0 0.0
        %694 = vmatprep.subr.mxu0 0.0
        %695 = vmatpush2.xpose.msra.mxu0 0.0
        %696 = vmatprep.subr.mxu0 0.0
        %697 = vmatpush2.xpose.msra.mxu0 0.0
        %698 = vmatprep.subr.mxu0 0.0
        %699 = vmatpush2.xpose.msra.mxu0 0.0
        %700 = vmatprep.subr.mxu0 0.0
        %701 = vmatpush2.xpose.msra.mxu0 0.0
        %702 = vmatprep.subr.mxu0 0.0
        %703 = vmatpush2.xpose.msra.mxu0 0.0
        %704 = vmatprep.subr.mxu0 0.0
        %705 = vmatpush2.xpose.msra.mxu0 0.0
        %706 = vmatprep.subr.mxu0 0.0
        %707 = vmatpush2.xpose.msra.mxu0 0.0
        %708 = vmatprep.subr.mxu0 0.0
        %709 = vmatpush2.xpose.msra.mxu0 0.0
        %710 = vmatprep.mubr.f32.mxu0 0.0
        %711 = vmatmul.mubr.f32.gmra.mxu0 %v629
        %v712 = vpop.f32.mrf.mxu0
        %v713 = vadd.f32 0.0, %v712
        %v714 = vpop.f32.mrf.mxu0
        %715 = vmatprep.mubr.f32.mxu0 0.0
        %716 = vmatmul.mubr.f32.gmra.mxu0 %v632
        %v717 = vpop.f32.mrf.mxu0
        %v718 = vadd.f32 0.0, %v717
        %v719 = vpop.f32.mrf.mxu0
        %720 = vmatprep.mubr.f32.mxu0 0.0
        %721 = vmatmul.mubr.f32.gmra.mxu0 %v635
        %v722 = vpop.f32.mrf.mxu0
        %v723 = vadd.f32 0.0, %v722
        %v724 = vpop.f32.mrf.mxu0
        %725 = vmatprep.mubr.f32.mxu0 0.0
        %726 = vmatmul.mubr.f32.gmra.mxu0 %v638
        %v727 = vpop.f32.mrf.mxu0
        %v728 = vadd.f32 0.0, %v727
        %v729 = vpop.f32.mrf.mxu0
        %730 = vdwg.mxu0
        %v731 = vsel %vm388, %v713, -inf
        %732 = vmax.xlane.f32.xlu0 %v731
        %v733 = vpop.xlane.xlu0 %732
        %v734 = vsel %vm388, %v718, -inf
        %735 = vmax.xlane.f32.xlu0 %v734
        %v736 = vpop.xlane.xlu0 %735
        %v737 = vsel %vm388, %v723, -inf
        %738 = vmax.xlane.f32.xlu0 %v737
        %v739 = vpop.xlane.xlu0 %738
        %v740 = vsel %vm388, %v728, -inf
        %741 = vmax.xlane.f32.xlu0 %v740
        %v742 = vpop.xlane.xlu0 %741
        %v743 = vsub.f32 %v713, %v733
        %v744 = vsub.f32 %v718, %v736
        %v745 = vsub.f32 %v723, %v739
        %v746 = vsub.f32 %v728, %v742
        %v747 = vmul.f32 %v743, 1.442695
        %v748 = vpow.pop %v747
        %v749 = vmul.f32 %v744, 1.442695
        %v750 = vpow.pop %v749
        %v751 = vmul.f32 %v745, 1.442695
        %v752 = vpow.pop %v751
        %v753 = vmul.f32 %v746, 1.442695
        %v754 = vpow.pop %v753
        %v755 = vsel %vm388, %v748, 0.0
        %756 = vadd.xlane.f32.xlu0 %v755
        %v757 = vpop.xlane.xlu0 %756
        %v758 = vsel %vm388, %v750, 0.0
        %759 = vadd.xlane.f32.xlu0 %v758
        %v760 = vpop.xlane.xlu0 %759
        %v761 = vsel %vm388, %v752, 0.0
        %762 = vadd.xlane.f32.xlu0 %v761
        %v763 = vpop.xlane.xlu0 %762
        %v764 = vsel %vm388, %v754, 0.0
        %765 = vadd.xlane.f32.xlu0 %v764
        %v766 = vpop.xlane.xlu0 %765
        %v767 = vrcp.pop %v757
        %v768 = vmul.f32 %v748, %v767
        %v769 = vrcp.pop %v760
        %v770 = vmul.f32 %v750, %v769
        %v771 = vrcp.pop %v763
        %v772 = vmul.f32 %v752, %v771
        %v773 = vrcp.pop %v766
        %v774 = vmul.f32 %v754, %v773
        %775 = vrot.lane.b32.xlu0 %v616, 96
        %v776 = vpop.permute.xlu0 %775
        %777 = vrot.lane.b32.xlu0 %v621, 96
        %v778 = vpop.permute.xlu0 %777
        %v782 = vsel %vm388, %v768, 0
        %v785 = vsel %vm388, %v770, 0
        %v788 = vsel %vm388, %v772, 0
        %v791 = vsel %vm388, %v774, 0
        %793 = vmatprep.subr.mxu0 0.0
        %794 = vmatpush1.msra.mxu0 0.0
        %795 = vmatprep.subr.mxu0 0.0
        %796 = vmatpush1.msra.mxu0 0.0
        %797 = vmatprep.subr.mxu0 0.0
        %798 = vmatpush1.msra.mxu0 0.0
        %799 = vmatprep.subr.mxu0 0.0
        %800 = vmatpush1.msra.mxu0 0.0
        %801 = vmatprep.subr.mxu0 0.0
        %802 = vmatpush1.msra.mxu0 0.0
        %803 = vmatprep.subr.mxu0 0.0
        %804 = vmatpush1.msra.mxu0 0.0
        %805 = vmatprep.subr.mxu0 0.0
        %806 = vmatpush1.msra.mxu0 0.0
        %807 = vmatprep.subr.mxu0 0.0
        %808 = vmatpush1.msra.mxu0 0.0
        %809 = vmatprep.subr.mxu0 0.0
        %810 = vmatpush1.msra.mxu0 0.0
        %811 = vmatprep.subr.mxu0 0.0
        %812 = vmatpush1.msra.mxu0 0.0
        %813 = vmatprep.subr.mxu0 0.0
        %814 = vmatpush1.msra.mxu0 0.0
        %815 = vmatprep.subr.mxu0 0.0
        %816 = vmatpush1.msra.mxu0 0.0
        %817 = vmatprep.subr.mxu0 0.0
        %818 = vmatpush1.msra.mxu0 0.0
        %819 = vmatprep.subr.mxu0 0.0
        %820 = vmatpush1.msra.mxu0 0.0
        %821 = vmatprep.subr.mxu0 0.0
        %822 = vmatpush1.msra.mxu0 %v778
        %823 = vmatprep.subr.mxu0 0.0
        %824 = vmatpush1.msra.mxu0 %v776
        %825 = vmatprep.subr.mxu0 0.0
        %826 = vmatpush2.msra.mxu0 0.0
        %827 = vmatprep.subr.mxu0 0.0
        %828 = vmatpush2.msra.mxu0 0.0
        %829 = vmatprep.subr.mxu0 0.0
        %830 = vmatpush2.msra.mxu0 0.0
        %831 = vmatprep.subr.mxu0 0.0
        %832 = vmatpush2.msra.mxu0 0.0
        %833 = vmatprep.subr.mxu0 0.0
        %834 = vmatpush2.msra.mxu0 0.0
        %835 = vmatprep.subr.mxu0 0.0
        %836 = vmatpush2.msra.mxu0 0.0
        %837 = vmatprep.subr.mxu0 0.0
        %838 = vmatpush2.msra.mxu0 0.0
        %839 = vmatprep.subr.mxu0 0.0
        %840 = vmatpush2.msra.mxu0 0.0
        %841 = vmatprep.subr.mxu0 0.0
        %842 = vmatpush2.msra.mxu0 0.0
        %843 = vmatprep.subr.mxu0 0.0
        %844 = vmatpush2.msra.mxu0 0.0
        %845 = vmatprep.subr.mxu0 0.0
        %846 = vmatpush2.msra.mxu0 0.0
        %847 = vmatprep.subr.mxu0 0.0
        %848 = vmatpush2.msra.mxu0 0.0
        %849 = vmatprep.subr.mxu0 0.0
        %850 = vmatpush2.msra.mxu0 0.0
        %851 = vmatprep.subr.mxu0 0.0
        %852 = vmatpush2.msra.mxu0 0.0
        %853 = vmatprep.subr.mxu0 0.0
        %854 = vmatpush2.msra.mxu0 0.0
        %855 = vmatprep.subr.mxu0 0.0
        %856 = vmatpush2.msra.mxu0 0.0
        %857 = vmatprep.mubr.f32.mxu0 0.0
        %858 = vmatmul.mubr.f32.gmra.mxu0 %v782
        %v859 = vpop.f32.mrf.mxu0
        %v860 = vadd.f32 0.0, %v859
        %v861 = vpop.f32.mrf.mxu0
        %862 = vmatprep.mubr.f32.mxu0 0.0
        %863 = vmatmul.mubr.f32.gmra.mxu0 %v785
        %v864 = vpop.f32.mrf.mxu0
        %v865 = vadd.f32 0.0, %v864
        %v866 = vpop.f32.mrf.mxu0
        %867 = vmatprep.mubr.f32.mxu0 0.0
        %868 = vmatmul.mubr.f32.gmra.mxu0 %v788
        %v869 = vpop.f32.mrf.mxu0
        %v870 = vadd.f32 0.0, %v869
        %v871 = vpop.f32.mrf.mxu0
        %872 = vmatprep.mubr.f32.mxu0 0.0
        %873 = vmatmul.mubr.f32.gmra.mxu0 %v791
        %v874 = vpop.f32.mrf.mxu0
        %v875 = vadd.f32 0.0, %v874
        %v876 = vpop.f32.mrf.mxu0
        %877 = vdwg.mxu0
        %v878 = vmul.f32 %v860, %v384
        %v879 = vmul.f32 %v865, %v385
        %v880 = vmul.f32 %v870, %v386
        %v881 = vmul.f32 %v875, %v387
        %v882 = vadd.f32 %v878, %v879
        %v883 = vadd.f32 %v882, %v880
        %v884 = vadd.f32 %v883, %v881
        %v885 = vld [vmem:[#allocation5] sm:$0xff]
        %v886 = vld [vmem:[#allocation5 + $0x8] sm:$0xff]
        %v887 = vld [vmem:[#allocation5 + $0x10] sm:$0xff]
        %v888 = vld [vmem:[#allocation5 + $0x18] sm:$0xff]
        %v889 = vlaneseq
        %v890 = vshrl.u32 %v889, 7
        %v891 = vsub.s32 0, %v890
        %v892 = vrot.slane %v381, %v891
        %v894 = vsel %vm428, %v884, 0
        %896 = vmatprep.subr.mxu0 0.0
        %897 = vmatpush1.msra.mxu0 0.0
        %898 = vmatprep.subr.mxu0 0.0
        %899 = vmatpush1.msra.mxu0 0.0
        %900 = vmatprep.subr.mxu0 0.0
        %901 = vmatpush1.msra.mxu0 0.0
        %902 = vmatprep.subr.mxu0 0.0
        %903 = vmatpush1.msra.mxu0 0.0
        %904 = vmatprep.subr.mxu0 0.0
        %905 = vmatpush1.msra.mxu0 0.0
        %906 = vmatprep.subr.mxu0 0.0
        %907 = vmatpush1.msra.mxu0 0.0
        %908 = vmatprep.subr.mxu0 0.0
        %909 = vmatpush1.msra.mxu0 0.0
        %910 = vmatprep.subr.mxu0 0.0
        %911 = vmatpush1.msra.mxu0 0.0
        %912 = vmatprep.subr.mxu0 0.0
        %913 = vmatpush1.msra.mxu0 0.0
        %914 = vmatprep.subr.mxu0 0.0
        %915 = vmatpush1.msra.mxu0 0.0
        %916 = vmatprep.subr.mxu0 0.0
        %917 = vmatpush1.msra.mxu0 0.0
        %918 = vmatprep.subr.mxu0 0.0
        %919 = vmatpush1.msra.mxu0 0.0
        %920 = vmatprep.subr.mxu0 0.0
        %921 = vmatpush1.msra.mxu0 %v888
        %922 = vmatprep.subr.mxu0 0.0
        %923 = vmatpush1.msra.mxu0 %v887
        %924 = vmatprep.subr.mxu0 0.0
        %925 = vmatpush1.msra.mxu0 %v886
        %926 = vmatprep.subr.mxu0 0.0
        %927 = vmatpush1.msra.mxu0 %v885
        %928 = vmatprep.subr.mxu0 0.0
        %929 = vmatpush2.msra.mxu0 0.0
        %930 = vmatprep.subr.mxu0 0.0
        %931 = vmatpush2.msra.mxu0 0.0
        %932 = vmatprep.subr.mxu0 0.0
        %933 = vmatpush2.msra.mxu0 0.0
        %934 = vmatprep.subr.mxu0 0.0
        %935 = vmatpush2.msra.mxu0 0.0
        %936 = vmatprep.subr.mxu0 0.0
        %937 = vmatpush2.msra.mxu0 0.0
        %938 = vmatprep.subr.mxu0 0.0
        %939 = vmatpush2.msra.mxu0 0.0
        %940 = vmatprep.subr.mxu0 0.0
        %941 = vmatpush2.msra.mxu0 0.0
        %942 = vmatprep.subr.mxu0 0.0
        %943 = vmatpush2.msra.mxu0 0.0
        %944 = vmatprep.subr.mxu0 0.0
        %945 = vmatpush2.msra.mxu0 0.0
        %946 = vmatprep.subr.mxu0 0.0
        %947 = vmatpush2.msra.mxu0 0.0
        %948 = vmatprep.subr.mxu0 0.0
        %949 = vmatpush2.msra.mxu0 0.0
        %950 = vmatprep.subr.mxu0 0.0
        %951 = vmatpush2.msra.mxu0 0.0
        %952 = vmatprep.subr.mxu0 0.0
        %953 = vmatpush2.msra.mxu0 0.0
        %954 = vmatprep.subr.mxu0 0.0
        %955 = vmatpush2.msra.mxu0 0.0
        %956 = vmatprep.subr.mxu0 0.0
        %957 = vmatpush2.msra.mxu0 0.0
        %958 = vmatprep.subr.mxu0 0.0
        %959 = vmatpush2.msra.mxu0 0.0
        %960 = vmatprep.mubr.f32.mxu0 0.0
        %961 = vmatmul.mubr.f32.gmra.mxu0 %v894
        %v962 = vpop.f32.mrf.mxu0
        %v963 = vadd.f32 %v892, %v962
        %v964 = vpop.f32.mrf.mxu0
        %965 = vdwg.mxu0
        %966 = vst.msk [vmem:[%s368] sm:$0xff] %vm428, %v963
        %s967 = sand.u32 %s227, 1
        %s968 = scalar_lea.sflag [#allocation4], %s967
        %s969 = sand.u32 %s227, 1
        %s970 = smul.addr %s969, 8
        %s971 = scalar_lea.vmem [#allocation8], %s970
        // Predicated region
        $region69: #{tpu_custom_call.1} parent=55 // pred_check
          %p972 = pneg %p237
        $region70: #{tpu_custom_call.1} parent=55 // pred_check_branch
          %974 = sbr.rel (%p972) target = $region72
        $region71: #{tpu_custom_call.1} parent=55 // pred_region
          %s976 = ssub.s32 128, 128
          %977 = vsyncadd %s968, %s976
          %s978 = smul.addr %s25, 128
          %s979 = scalar_lea.hbm %s9, %s978
          %s981 = sshll.u32 %s971, 4
          %s982 = int_to_ptr.vmem [resolvable:$true] %s981
          %984 = dma.vmem_to_hbm [thread:$0]  %s982, 128, %s979, %s968
        $region72: #{tpu_custom_call.1} parent=55 // pred_fallthru
          _
      $region56: #{tpu_custom_call.1} parent=5 // pred_fallthru
        _
      %p985 = scmp.le.s32.totalorder 2, %s20
      // Predicated region
      $region73: #{tpu_custom_call.1} parent=5 // pred_check
        %p986 = pneg %p985
      $region74: #{tpu_custom_call.1} parent=5 // pred_check_branch
        %988 = sbr.rel (%p986) target = $region76
      $region75: #{tpu_custom_call.1} parent=5 // pred_region
        %s989 = ssub.s32 %s20, 2
        // Predicated region
        $region77: #{tpu_custom_call.1} parent=75 // pred_check
          %p990 = pneg %p243
        $region78: #{tpu_custom_call.1} parent=75 // pred_check_branch
          %992 = sbr.rel (%p990) target = $region80
        $region79: #{tpu_custom_call.1} parent=75 // pred_region
          %s993 = sand.u32 %s228, 1
          %s994 = scalar_lea.sflag [#allocation4], %s993
          %s995 = sand.u32 %s228, 1
          %s996 = smul.addr %s995, 8
          %s997 = scalar_lea.vmem [#allocation8], %s996
          %998 = dma.done %s994, 128
        $region80: #{tpu_custom_call.1} parent=75 // pred_fallthru
          _
      $region76: #{tpu_custom_call.1} parent=5 // pred_fallthru
        _
    $region6: #{tpu_custom_call.1} parent=1 // loop_footer
      %s24 = sadd.s32 1, %s20
    $region7: #{tpu_custom_call.1} parent=1 // loop_footer_branch
      %19 = sbr.rel target = $region3
    $region8: #{tpu_custom_call.1} parent=1 // loop_exit
      _
    %999 = vsyncpa [#allocation3], 1
    %s1000 = scalar_lea.sflag [#allocation3], 1
    %1001 = vsyncpa %s1000, 1
    %1002 = vsyncpa [#allocation6], 1
    %1003 = vsyncpa [#allocation4], 1
    %s1004 = scalar_lea.sflag [#allocation4], 1
    %1005 = vsyncpa %s1004, 1

</llo_original>
